<compile_context>
chip_gen: v7x
topology: tpu7x:2x2x1
jax: 0.10.0
libtpu: 0.0.40
codegen_flags: <defaults>
</compile_context>

<pallas_src>
import jax
import jax.numpy as jnp
from jax.experimental import pallas as pl
from jax.experimental.pallas import tpu as pltpu

# Pendulum-v0 dimensions (from the module's surrounding script).
STATE_DIM = 3
ACTION_DIM = 1
HIDDEN_DIM = 64


def _round_up(n, m):
    return ((n + m - 1) // m) * m


def valuenet_kernel(catT_ref, w1b1_ref, w2b2_ref, out_ref):
    k = catT_ref.shape[0]          # S + A   (feature axis, sublanes)
    h = w1b1_ref.shape[0]          # hidden dim

    w1b1 = w1b1_ref[...]           # (H, S+A+1) resident, f32
    w2b2 = w2b2_ref[...]           # (1, H+1)   resident, f32

    # fc1 on the MXU: (H, S+A) @ (S+A, tb) -> (H, tb), f32 operands + accumulate.
    hid = jnp.dot(w1b1[:, :k], catT_ref[...], preferred_element_type=jnp.float32)
    # Bias (H,1) broadcasts along the lane (batch) axis; ReLU on the VPU.
    hid = jnp.maximum(hid + w1b1[:, k:], 0.0)
    # fc2 on the MXU: (1, H) @ (H, tb) -> (1, tb) lane-dense output row.
    out = jnp.dot(w2b2[:, :h], hid, preferred_element_type=jnp.float32)
    out_ref[...] = out + w2b2[:, h:]          # + scalar b2 (broadcast (1,1) -> (1,tb))


def value_net_forward(x, a, w1, b1, w2, b2, *, block_cols=2048):
    """x: (B, STATE_DIM), a: (B, ACTION_DIM), weights stored (in, out). Returns (B, 1) f32."""
    B, sd = x.shape
    ad = a.shape[1]
    H = w1.shape[1]
    k = sd + ad

    # Pack resident parameters: [W1^T | b1] -> (H, S+A+1), [W2^T | b2] -> (1, H+1).
    w1b1 = jnp.concatenate(
        [w1.T.astype(jnp.float32), b1.reshape(H, 1).astype(jnp.float32)], axis=1)
    w2b2 = jnp.concatenate(
        [w2.reshape(1, H).astype(jnp.float32), b2.reshape(1, 1).astype(jnp.float32)],
        axis=1)

    # Feature-major input: (S+A, B), batch on the lane axis (wrapper-side layout
    # plumbing; XLA transpose of a (B,4) array is negligible).
    catT = jnp.concatenate([x, a], axis=1).astype(jnp.float32).T

    # Batch tile on lanes: multiple of 128.  Ensure >= 2 grid steps whenever the
    # batch spans more than one 128-lane tile (v7x dual TensorCores under
    # dimension_semantics=("parallel",)).
    B128 = _round_up(B, 128)
    tb = _round_up(min(block_cols, B128), 128)
    if B128 >= 2 * 128 and tb >= B128:
        tb = _round_up(B128 // 2, 128)
    Bp = _round_up(B, tb)
    if Bp != B:
        # Padded (zero) columns produce garbage relu(b1)@w2 + b2; sliced off below.
        catT = jnp.pad(catT, ((0, 0), (0, Bp - B)))

    out = pl.pallas_call(
        valuenet_kernel,
        out_shape=jax.ShapeDtypeStruct((1, Bp), jnp.float32),
        grid=(Bp // tb,),
        in_specs=[
            pl.BlockSpec((k, tb), lambda i: (0, i)),        # catT        (batch-tiled)
            pl.BlockSpec(w1b1.shape, lambda i: (0, 0)),     # [W1^T | b1] (resident)
            pl.BlockSpec(w2b2.shape, lambda i: (0, 0)),     # [W2^T | b2] (resident)
        ],
        out_specs=pl.BlockSpec((1, tb), lambda i: (0, i)),  # lane-dense output row
        compiler_params=pltpu.CompilerParams(
            dimension_semantics=("parallel",),
        ),
    )(catT, w1b1, w2b2)
    return out[0, :B].reshape(B, 1)


def init_params(key):
    """PyTorch Linear default init (U[-1/sqrt(fan_in), +1/sqrt(fan_in)]),
    with weights stored as (in_features, out_features)."""
    k1, k2, k3, k4 = jax.random.split(key, 4)
    in1 = STATE_DIM + ACTION_DIM
    bound1 = 1.0 / jnp.sqrt(in1)
    bound2 = 1.0 / jnp.sqrt(HIDDEN_DIM)
    w1 = jax.random.uniform(k1, (in1, HIDDEN_DIM), jnp.float32, -bound1, bound1)
    b1 = jax.random.uniform(k2, (HIDDEN_DIM,), jnp.float32, -bound1, bound1)
    w2 = jax.random.uniform(k3, (HIDDEN_DIM, 1), jnp.float32, -bound2, bound2)
    b2 = jax.random.uniform(k4, (1,), jnp.float32, -bound2, bound2)
    return w1, b1, w2, b2


def _reference_f32(x, a, w1, b1, w2, b2):
    # Exact PyTorch-semantics reference in f32.
    cat = jnp.concatenate([x, a], axis=1)
    return jnp.maximum(cat @ w1 + b1, 0.0) @ w2 + b2


if __name__ == "__main__":
    key = jax.random.PRNGKey(0)
    kx, ka, kp = jax.random.split(key, 3)
    w1, b1, w2, b2 = init_params(kp)

    # Small, module-consistent shapes (Pendulum: state=3, action=1, hidden=64).
    B = 8
    x = jax.random.normal(kx, (B, STATE_DIM), jnp.float32)
    a = jax.random.normal(ka, (B, ACTION_DIM), jnp.float32)

    out = jax.block_until_ready(value_net_forward(x, a, w1, b1, w2, b2))
    assert out.shape == (B, 1)
    # Tolerance covers possible default-precision (multi-pass bf16) f32 MXU matmuls
    # on either side; much tighter than the old bf16-operand 5e-2 check.
    assert jnp.allclose(out, _reference_f32(x, a, w1, b1, w2, b2),
                        atol=5e-3, rtol=5e-3), "mismatch vs f32 reference"

    # Exercise the multi-step parallel grid + lane-padding path.
    B2 = 2000
    kx2, ka2 = jax.random.split(jax.random.PRNGKey(1))
    x2 = jax.random.normal(kx2, (B2, STATE_DIM), jnp.float32)
    a2 = jax.random.normal(ka2, (B2, ACTION_DIM), jnp.float32)
    out2 = jax.block_until_ready(
        value_net_forward(x2, a2, w1, b1, w2, b2, block_cols=512))
    assert out2.shape == (B2, 1)
    assert jnp.allclose(out2, _reference_f32(x2, a2, w1, b1, w2, b2),
                        atol=5e-3, rtol=5e-3), "mismatch on gridded batch"

    # TODO(synk): at the production batch (~8) this net should be fused into the
    # actor/critic-update kernel (or left to XLA); standalone launch/step overhead dominates.
    print("KERNEL_OK")
</pallas_src>

<mosaic_0001>
module attributes {stable_mosaic.version = 11 : i64} {
  func.func @valuenet_kernel(%arg0: i32, %arg1: memref<4x128xf32, #tpu.memory_space<vmem>>, %arg2: memref<64x5xf32, #tpu.memory_space<vmem>>, %arg3: memref<1x65xf32, #tpu.memory_space<vmem>>, %arg4: memref<1x128xf32, #tpu.memory_space<vmem>>) attributes {dimension_semantics = [#tpu.dimension_semantics<parallel>], iteration_bounds = array<i64: 1>, scalar_prefetch = 0 : i64, scratch_operands = 0 : i64, tpu.core_type = #tpu.core_type<tc>, window_params = [{transform_indices = @transform_0, window_bounds = array<i64: 4, 128>}, {pipeline_mode = #tpu.pipeline_mode<synchronous>, transform_indices = @transform_1, window_bounds = array<i64: 64, 5>}, {pipeline_mode = #tpu.pipeline_mode<synchronous>, transform_indices = @transform_2, window_bounds = array<i64: 1, 65>}, {transform_indices = @transform_3, window_bounds = array<i64: 1, 128>}]} {
    %c0 = arith.constant 0 : index
    %c0_0 = arith.constant 0 : index
    %0 = vector.load %arg2[%c0, %c0_0] : memref<64x5xf32, #tpu.memory_space<vmem>>, vector<64x5xf32>
    %c0_1 = arith.constant 0 : index
    %c0_2 = arith.constant 0 : index
    %1 = vector.load %arg3[%c0_1, %c0_2] : memref<1x65xf32, #tpu.memory_space<vmem>>, vector<1x65xf32>
    %2 = vector.extract_strided_slice %0 {offsets = [0, 0], sizes = [64, 4], strides = [1, 1]} : vector<64x5xf32> to vector<64x4xf32>
    %c0_3 = arith.constant 0 : index
    %c0_4 = arith.constant 0 : index
    %3 = vector.load %arg1[%c0_3, %c0_4] : memref<4x128xf32, #tpu.memory_space<vmem>>, vector<4x128xf32>
    %cst = arith.constant dense<0.000000e+00> : vector<64x128xf32>
    %4 = tpu.matmul %2, %3, %cst {dimension_numbers = #tpu.dot_dimension_numbers<[1], [0], [0], [1], [0, 0, 1, 1], [], []>} : vector<64x4xf32>, vector<4x128xf32>, vector<64x128xf32> -> vector<64x128xf32>
    %5 = vector.extract_strided_slice %0 {offsets = [0, 4], sizes = [64, 1], strides = [1, 1]} : vector<64x5xf32> to vector<64x1xf32>
    %6 = vector.broadcast %5 : vector<64x1xf32> to vector<64x128xf32>
    %7 = arith.addf %4, %6 : vector<64x128xf32>
    %cst_5 = arith.constant 0.000000e+00 : f32
    %8 = vector.broadcast %cst_5 : f32 to vector<64x128xf32>
    %9 = arith.maximumf %7, %8 : vector<64x128xf32>
    %10 = vector.extract_strided_slice %1 {offsets = [0, 0], sizes = [1, 64], strides = [1, 1]} : vector<1x65xf32> to vector<1x64xf32>
    %cst_6 = arith.constant dense<0.000000e+00> : vector<1x128xf32>
    %11 = tpu.matmul %10, %9, %cst_6 {dimension_numbers = #tpu.dot_dimension_numbers<[1], [0], [0], [1], [0, 0, 1, 1], [], []>} : vector<1x64xf32>, vector<64x128xf32>, vector<1x128xf32> -> vector<1x128xf32>
    %12 = vector.extract_strided_slice %1 {offsets = [0, 64], sizes = [1, 1], strides = [1, 1]} : vector<1x65xf32> to vector<1x1xf32>
    %13 = vector.broadcast %12 : vector<1x1xf32> to vector<1x128xf32>
    %14 = arith.addf %11, %13 : vector<1x128xf32>
    %c0_7 = arith.constant 0 : index
    %c0_8 = arith.constant 0 : index
    %15 = vector.load %arg4[%c0_7, %c0_8] : memref<1x128xf32, #tpu.memory_space<vmem>>, vector<1x128xf32>
    tpu.vector_store %arg4[%c0_7, %c0_8], %14 {strides = array<i32>} : memref<1x128xf32, #tpu.memory_space<vmem>>, vector<1x128xf32>,
    return
  }
  func.func @transform_0(%arg0: i32) -> (i32, i32) {
    %c0_i32 = arith.constant 0 : i32
    %c0_i32_0 = arith.constant 0 : i32
    return %c0_i32, %arg0 : i32, i32
  }
  func.func @transform_1(%arg0: i32) -> (i32, i32) {
    %c0_i32 = arith.constant 0 : i32
    %c0_i32_0 = arith.constant 0 : i32
    %c0_i32_1 = arith.constant 0 : i32
    return %c0_i32, %c0_i32_0 : i32, i32
  }
  func.func @transform_2(%arg0: i32) -> (i32, i32) {
    %c0_i32 = arith.constant 0 : i32
    %c0_i32_0 = arith.constant 0 : i32
    %c0_i32_1 = arith.constant 0 : i32
    return %c0_i32, %c0_i32_0 : i32, i32
  }
  func.func @transform_3(%arg0: i32) -> (i32, i32) {
    %c0_i32 = arith.constant 0 : i32
    %c0_i32_0 = arith.constant 0 : i32
    return %c0_i32, %arg0 : i32, i32
  }
}

</mosaic_0001>

<llo_original>
// kernel: tpu_custom_call.1
$region0: #{tpu_custom_call.1}
  #allocation0 [shape = 'u32[]', space=smem, size = 0x4, offset = 0x4, fixed_abs, tag = 'smem constant byte address 0x4 - core index']
  #allocation1 [shape = 'u32[144,128]{1,0:T(1,128)}', space=vmem, size = 0x12000, scoped, tag = 'internal scratch']
  %s0 = inlined_call_operand.vmem [shape: f32[4,128], index: 0, kind: input, shape index: {}]
  %s1 = inlined_call_operand.vmem [shape: f32[64,5], index: 1, kind: input, shape index: {}]
  %s2 = inlined_call_operand.vmem [shape: f32[1,65], index: 2, kind: input, shape index: {}]
  %s3 = inlined_call_operand.hbm [shape: f32[1,128], index: 3, kind: output, shape index: {}]
  %s4 = sld [smem:[#allocation0]]
  $region22: #{tpu_custom_call.1} parent=0
    _
  %s6 = ssub.s32 1, %s4
  %s7 = scalar_select 0, %s6, %s4
  $region1: #{tpu_custom_call.1} parent=0
    #allocation2 [shape = 'u8[512]{0}', space=vmem, size = 0x400, scoped, tag = 'output window, operand 0, single buffered']
    #allocation3 [shape = 's32[1]{0}', space=sflag, size = 0x4, scoped, tag = 'scoped memory for tpu_custom_call.1']
    %8 = vsyncpa [#allocation3], 0
    // Predicated region
    $region2: #{tpu_custom_call.1} parent=1 // pred_check
      _
    $region3: #{tpu_custom_call.1} parent=1 // pred_check_branch
      %10 = sbr.rel (0) target = $region5
    $region4: #{tpu_custom_call.1} parent=1 // pred_region
      _
    $region5: #{tpu_custom_call.1} parent=1 // pred_fallthru
      _
    // Predicated region
    $region6: #{tpu_custom_call.1} parent=1 // pred_check
      _
    $region7: #{tpu_custom_call.1} parent=1 // pred_check_branch
      %12 = sbr.rel (0) target = $region9
    $region8: #{tpu_custom_call.1} parent=1 // pred_region
      _
    $region9: #{tpu_custom_call.1} parent=1 // pred_fallthru
      _
    // Predicated region
    $region10: #{tpu_custom_call.1} parent=1 // pred_check
      _
    $region11: #{tpu_custom_call.1} parent=1 // pred_check_branch
      %14 = sbr.rel (0) target = $region13
    $region12: #{tpu_custom_call.1} parent=1 // pred_region
      _
    $region13: #{tpu_custom_call.1} parent=1 // pred_fallthru
      _
    %v15 = vld [vmem:[%s1] sm:$0xff]
    %v16 = vld [vmem:[%s1 + $0x8] sm:$0xff]
    %v17 = vld [vmem:[%s1 + $0x10] sm:$0xff]
    %v18 = vld [vmem:[%s1 + $0x18] sm:$0xff]
    %v19 = vld [vmem:[%s1 + $0x20] sm:$0xff]
    %v20 = vld [vmem:[%s1 + $0x28] sm:$0xff]
    %v21 = vld [vmem:[%s1 + $0x30] sm:$0xff]
    %v22 = vld [vmem:[%s1 + $0x38] sm:$0xff]
    %v23 = vld [vmem:[%s2] sm:$0x1]
    %v24 = vld [vmem:[%s0] sm:$0xf]
    %26 = vset.pattern.permute.xlu0 4
    %27 = vperm.xlu0 %26, %v15
    %v28 = vpop.permute.xlu0 %27
    %31 = vset.pattern.permute.xlu0 4
    %32 = vperm.xlu0 %31, %v16
    %v33 = vpop.permute.xlu0 %32
    %36 = vset.pattern.permute.xlu0 4
    %37 = vperm.xlu0 %36, %v17
    %v38 = vpop.permute.xlu0 %37
    %41 = vset.pattern.permute.xlu0 4
    %42 = vperm.xlu0 %41, %v18
    %v43 = vpop.permute.xlu0 %42
    %46 = vset.pattern.permute.xlu0 4
    %47 = vperm.xlu0 %46, %v19
    %v48 = vpop.permute.xlu0 %47
    %51 = vset.pattern.permute.xlu0 4
    %52 = vperm.xlu0 %51, %v20
    %v53 = vpop.permute.xlu0 %52
    %56 = vset.pattern.permute.xlu0 4
    %57 = vperm.xlu0 %56, %v21
    %v58 = vpop.permute.xlu0 %57
    %61 = vset.pattern.permute.xlu0 4
    %62 = vperm.xlu0 %61, %v22
    %v63 = vpop.permute.xlu0 %62
    %vm65 = vcmask 31744
    %v66 = vsel %vm65, %v15, 0
    %v68 = vsel %vm65, %v16, 0
    %v70 = vsel %vm65, %v17, 0
    %v72 = vsel %vm65, %v18, 0
    %v74 = vsel %vm65, %v19, 0
    %v76 = vsel %vm65, %v20, 0
    %v78 = vsel %vm65, %v21, 0
    %v80 = vsel %vm65, %v22, 0
    %vm82 = vcmask 1043456
    %v84 = vsel %vm82, %v24, 0
    %86 = vmatprep.subr.mxu0 0.0
    %87 = vmatpush1.msra.mxu0 %v84
    %88 = vmatprep.subr.mxu0 0.0
    %89 = vmatpush1.msra.mxu0 0.0
    %90 = vmatprep.subr.mxu0 0.0
    %91 = vmatpush1.msra.mxu0 0.0
    %92 = vmatprep.subr.mxu0 0.0
    %93 = vmatpush1.msra.mxu0 0.0
    %94 = vmatprep.subr.mxu0 0.0
    %95 = vmatpush1.msra.mxu0 0.0
    %96 = vmatprep.subr.mxu0 0.0
    %97 = vmatpush1.msra.mxu0 0.0
    %98 = vmatprep.subr.mxu0 0.0
    %99 = vmatpush1.msra.mxu0 0.0
    %100 = vmatprep.subr.mxu0 0.0
    %101 = vmatpush1.msra.mxu0 0.0
    %102 = vmatprep.subr.mxu0 0.0
    %103 = vmatpush1.msra.mxu0 0.0
    %104 = vmatprep.subr.mxu0 0.0
    %105 = vmatpush1.msra.mxu0 0.0
    %106 = vmatprep.subr.mxu0 0.0
    %107 = vmatpush1.msra.mxu0 0.0
    %108 = vmatprep.subr.mxu0 0.0
    %109 = vmatpush1.msra.mxu0 0.0
    %110 = vmatprep.subr.mxu0 0.0
    %111 = vmatpush1.msra.mxu0 0.0
    %112 = vmatprep.subr.mxu0 0.0
    %113 = vmatpush1.msra.mxu0 0.0
    %114 = vmatprep.subr.mxu0 0.0
    %115 = vmatpush1.msra.mxu0 0.0
    %116 = vmatprep.subr.mxu0 0.0
    %117 = vmatpush1.msra.mxu0 0.0
    %118 = vmatprep.subr.mxu0 0.0
    %119 = vmatpush1.msra.mxu0 0.0
    %120 = vmatprep.subr.mxu0 0.0
    %121 = vmatpush1.msra.mxu0 0.0
    %122 = vmatprep.subr.mxu0 0.0
    %123 = vmatpush1.msra.mxu0 0.0
    %124 = vmatprep.subr.mxu0 0.0
    %125 = vmatpush1.msra.mxu0 0.0
    %126 = vmatprep.subr.mxu0 0.0
    %127 = vmatpush1.msra.mxu0 0.0
    %128 = vmatprep.subr.mxu0 0.0
    %129 = vmatpush1.msra.mxu0 0.0
    %130 = vmatprep.subr.mxu0 0.0
    %131 = vmatpush1.msra.mxu0 0.0
    %132 = vmatprep.subr.mxu0 0.0
    %133 = vmatpush1.msra.mxu0 0.0
    %134 = vmatprep.subr.mxu0 0.0
    %135 = vmatpush1.msra.mxu0 0.0
    %136 = vmatprep.subr.mxu0 0.0
    %137 = vmatpush1.msra.mxu0 0.0
    %138 = vmatprep.subr.mxu0 0.0
    %139 = vmatpush1.msra.mxu0 0.0
    %140 = vmatprep.subr.mxu0 0.0
    %141 = vmatpush1.msra.mxu0 0.0
    %142 = vmatprep.subr.mxu0 0.0
    %143 = vmatpush1.msra.mxu0 0.0
    %144 = vmatprep.subr.mxu0 0.0
    %145 = vmatpush1.msra.mxu0 0.0
    %146 = vmatprep.subr.mxu0 0.0
    %147 = vmatpush1.msra.mxu0 0.0
    %148 = vmatprep.subr.mxu0 0.0
    %149 = vmatpush1.msra.mxu0 0.0
    %150 = vmatprep.mubr.f32.mxu0 0.0
    %151 = vmatmul.mubr.f32.gmra.mrb[0].mxu0 %v66
    %v152 = vpop.f32.mrb[0].mxu0
    %v153 = vadd.f32 %v28, %v152
    %v154 = vpop.f32.mrb[0].mxu0
    %155 = vmatprep.mubr.f32.mxu0 0.0
    %156 = vmatmul.mubr.f32.gmra.mrb[0].mxu0 %v68
    %v157 = vpop.f32.mrb[0].mxu0
    %v158 = vadd.f32 %v33, %v157
    %v159 = vpop.f32.mrb[0].mxu0
    %160 = vmatprep.mubr.f32.mxu0 0.0
    %161 = vmatmul.mubr.f32.gmra.mrb[0].mxu0 %v70
    %v162 = vpop.f32.mrb[0].mxu0
    %v163 = vadd.f32 %v38, %v162
    %v164 = vpop.f32.mrb[0].mxu0
    %165 = vmatprep.mubr.f32.mxu0 0.0
    %166 = vmatmul.mubr.f32.gmra.mrb[0].mxu0 %v72
    %v167 = vpop.f32.mrb[0].mxu0
    %v168 = vadd.f32 %v43, %v167
    %v169 = vpop.f32.mrb[0].mxu0
    %170 = vmatprep.mubr.f32.mxu0 0.0
    %171 = vmatmul.mubr.f32.gmra.mrb[0].mxu0 %v74
    %v172 = vpop.f32.mrb[0].mxu0
    %v173 = vadd.f32 %v48, %v172
    %v174 = vpop.f32.mrb[0].mxu0
    %175 = vmatprep.mubr.f32.mxu0 0.0
    %176 = vmatmul.mubr.f32.gmra.mrb[0].mxu0 %v76
    %v177 = vpop.f32.mrb[0].mxu0
    %v178 = vadd.f32 %v53, %v177
    %v179 = vpop.f32.mrb[0].mxu0
    %180 = vmatprep.mubr.f32.mxu0 0.0
    %181 = vmatmul.mubr.f32.gmra.mrb[0].mxu0 %v78
    %v182 = vpop.f32.mrb[0].mxu0
    %v183 = vadd.f32 %v58, %v182
    %v184 = vpop.f32.mrb[0].mxu0
    %185 = vmatprep.mubr.f32.mxu0 0.0
    %186 = vmatmul.mubr.f32.gmra.mrb[0].mxu0 %v80
    %v187 = vpop.f32.mrb[0].mxu0
    %v188 = vadd.f32 %v63, %v187
    %v189 = vpop.f32.mrb[0].mxu0
    %190 = vdwg.mxu0
    %v191 = vmax.f32 %v153, 0.0
    %v192 = vmax.f32 %v158, 0.0
    %v193 = vmax.f32 %v163, 0.0
    %v194 = vmax.f32 %v168, 0.0
    %v195 = vmax.f32 %v173, 0.0
    %v196 = vmax.f32 %v178, 0.0
    %v197 = vmax.f32 %v183, 0.0
    %v198 = vmax.f32 %v188, 0.0
    %200 = vset.pattern.permute.xlu0 64
    %201 = vperm.xlu0 %200, %v23
    %v202 = vpop.permute.xlu0 %201
    %v204 = vlaneseq
    %v205 = vshrl.u32 %v204, 7
    %v206 = vsub.s32 0, %v205
    %v207 = vrot.slane %v202, %v206
    %vm208 = vcmask 523264
    %v209 = vsel %vm208, %v23, 0
    %211 = vmatprep.subr.mxu0 0.0
    %212 = vmatpush1.msra.mxu0 %v191
    %213 = vmatprep.subr.mxu0 0.0
    %214 = vmatpush1.msra.mxu0 %v192
    %215 = vmatprep.subr.mxu0 0.0
    %216 = vmatpush1.msra.mxu0 %v193
    %217 = vmatprep.subr.mxu0 0.0
    %218 = vmatpush1.msra.mxu0 %v194
    %219 = vmatprep.subr.mxu0 0.0
    %220 = vmatpush1.msra.mxu0 %v195
    %221 = vmatprep.subr.mxu0 0.0
    %222 = vmatpush1.msra.mxu0 %v196
    %223 = vmatprep.subr.mxu0 0.0
    %224 = vmatpush1.msra.mxu0 %v197
    %225 = vmatprep.subr.mxu0 0.0
    %226 = vmatpush1.msra.mxu0 %v198
    %227 = vmatprep.subr.mxu0 0.0
    %228 = vmatpush1.msra.mxu0 0.0
    %229 = vmatprep.subr.mxu0 0.0
    %230 = vmatpush1.msra.mxu0 0.0
    %231 = vmatprep.subr.mxu0 0.0
    %232 = vmatpush1.msra.mxu0 0.0
    %233 = vmatprep.subr.mxu0 0.0
    %234 = vmatpush1.msra.mxu0 0.0
    %235 = vmatprep.subr.mxu0 0.0
    %236 = vmatpush1.msra.mxu0 0.0
    %237 = vmatprep.subr.mxu0 0.0
    %238 = vmatpush1.msra.mxu0 0.0
    %239 = vmatprep.subr.mxu0 0.0
    %240 = vmatpush1.msra.mxu0 0.0
    %241 = vmatprep.subr.mxu0 0.0
    %242 = vmatpush1.msra.mxu0 0.0
    %243 = vmatprep.subr.mxu0 0.0
    %244 = vmatpush1.msra.mxu0 0.0
    %245 = vmatprep.subr.mxu0 0.0
    %246 = vmatpush1.msra.mxu0 0.0
    %247 = vmatprep.subr.mxu0 0.0
    %248 = vmatpush1.msra.mxu0 0.0
    %249 = vmatprep.subr.mxu0 0.0
    %250 = vmatpush1.msra.mxu0 0.0
    %251 = vmatprep.subr.mxu0 0.0
    %252 = vmatpush1.msra.mxu0 0.0
    %253 = vmatprep.subr.mxu0 0.0
    %254 = vmatpush1.msra.mxu0 0.0
    %255 = vmatprep.subr.mxu0 0.0
    %256 = vmatpush1.msra.mxu0 0.0
    %257 = vmatprep.subr.mxu0 0.0
    %258 = vmatpush1.msra.mxu0 0.0
    %259 = vmatprep.subr.mxu0 0.0
    %260 = vmatpush1.msra.mxu0 0.0
    %261 = vmatprep.subr.mxu0 0.0
    %262 = vmatpush1.msra.mxu0 0.0
    %263 = vmatprep.subr.mxu0 0.0
    %264 = vmatpush1.msra.mxu0 0.0
    %265 = vmatprep.subr.mxu0 0.0
    %266 = vmatpush1.msra.mxu0 0.0
    %267 = vmatprep.subr.mxu0 0.0
    %268 = vmatpush1.msra.mxu0 0.0
    %269 = vmatprep.subr.mxu0 0.0
    %270 = vmatpush1.msra.mxu0 0.0
    %271 = vmatprep.subr.mxu0 0.0
    %272 = vmatpush1.msra.mxu0 0.0
    %273 = vmatprep.subr.mxu0 0.0
    %274 = vmatpush1.msra.mxu0 0.0
    %275 = vmatprep.mubr.f32.mxu0 0.0
    %276 = vmatmul.mubr.f32.gmra.mrb[0].mxu0 %v209
    %v277 = vpop.f32.mrb[0].mxu0
    %v278 = vadd.f32 %v207, %v277
    %v279 = vpop.f32.mrb[0].mxu0
    %280 = vdwg.mxu0
    %281 = vst [vmem:[#allocation2] sm:$0x1] %v278
    // Predicated region
    $region14: #{tpu_custom_call.1} parent=1 // pred_check
      _
    $region15: #{tpu_custom_call.1} parent=1 // pred_check_branch
      %283 = sbr.rel (0) target = $region17
    $region16: #{tpu_custom_call.1} parent=1 // pred_region
      %s285 = ssub.s32 16, 16
      %286 = vsyncadd [#allocation3], %s285
      %s288 = sshll.u32 [#allocation2], 4
      %s289 = int_to_ptr.vmem [resolvable:$true] %s288
      %291 = dma.vmem_to_hbm [thread:$0]  %s289, 16, %s3, [#allocation3]
    $region17: #{tpu_custom_call.1} parent=1 // pred_fallthru
      _
    // Predicated region
    $region18: #{tpu_custom_call.1} parent=1 // pred_check
      _
    $region19: #{tpu_custom_call.1} parent=1 // pred_check_branch
      %293 = sbr.rel (0) target = $region21
    $region20: #{tpu_custom_call.1} parent=1 // pred_region
      %294 = dma.done [#allocation3], 16
    $region21: #{tpu_custom_call.1} parent=1 // pred_fallthru
      _
    %295 = vsyncpa [#allocation3], 1

</llo_original>
